<compile_context>
chip_gen: v7x
topology: tpu7x:2x2x1
jax: 0.10.0
libtpu: 0.0.40
codegen_flags: <defaults>
</compile_context>

<pallas_src>
import jax
import jax.numpy as jnp
from jax.experimental import pallas as pl
from jax.experimental.pallas import tpu as pltpu

K = 5        # kernel_size
PAD = 2      # padding
EPS = 1e-5   # BatchNorm eps
_VMEM_LIMIT = 48 * 1024 * 1024   # safe on v7x (64 MiB/TC), plenty on v5e/v6e


def _conv_relu_stats_kernel(x_ref, scale_ref, shift_ref, w_ref, b_ref,
                            h_ref, sum_ref, sq_ref, xp_ref):
    """One batch element: per-channel FMA (previous BN) -> Conv1d(k=5,pad=2)
    -> bias -> ReLU, plus one-pass per-channel sum / sum-of-squares.

    x_ref    : (1, Cin, L)       input block (channels on sublanes, L on lanes)
    scale_ref: (Cin, 1)          per-channel pre-scale  (ones for the first conv)
    shift_ref: (Cin, 1)          per-channel pre-shift  (zeros for the first conv)
    w_ref    : (K, Cout, Cin)    per-tap weight matrices
    b_ref    : (Cout, 1)         conv bias
    h_ref    : (1, Cout, L)      ReLU(conv(...)) output block
    sum_ref  : (1, Cout, 1)      per-block per-channel sum of h
    sq_ref   : (1, Cout, 1)      per-block per-channel sum of h*h
    xp_ref   : (Cin, L + 2*PAD)  VMEM scratch: zero-padded, pre-scaled input
    """
    cin = x_ref.shape[1]
    L = x_ref.shape[2]
    cout = h_ref.shape[1]

    # In-kernel zero padding: write only the 2 halo columns on each side.
    xp_ref[:, :PAD] = jnp.zeros((cin, PAD), jnp.float32)
    xp_ref[:, L + PAD:L + 2 * PAD] = jnp.zeros((cin, PAD), jnp.float32)
    # Previous BatchNorm folded into a single per-channel FMA.
    xp_ref[:, PAD:PAD + L] = x_ref[0] * scale_ref[...] + shift_ref[...]

    # K full-length per-tap matmuls (lane-dense), accumulated in f32.
    acc = jnp.zeros((cout, L), jnp.float32)
    for k in range(K):
        acc = acc + jnp.dot(w_ref[k], xp_ref[:, k:k + L],
                            preferred_element_type=jnp.float32)
    h = jnp.maximum(acc + b_ref[...], 0.0)
    h_ref[0] = h

    # One-pass BN statistics while h is still live.
    sum_ref[0] = jnp.sum(h, axis=1, keepdims=True)
    sq_ref[0] = jnp.sum(h * h, axis=1, keepdims=True)


def _bn_apply_kernel(h_ref, scale_ref, shift_ref, o_ref):
    o_ref[0] = h_ref[0] * scale_ref[...] + shift_ref[...]


def _conv_relu_stats(x, scale, shift, w, b):
    N, cin, L = x.shape
    cout = w.shape[1]
    return pl.pallas_call(
        _conv_relu_stats_kernel,
        out_shape=(jax.ShapeDtypeStruct((N, cout, L), jnp.float32),
                   jax.ShapeDtypeStruct((N, cout, 1), jnp.float32),
                   jax.ShapeDtypeStruct((N, cout, 1), jnp.float32)),
        grid=(N,),
        in_specs=[
            pl.BlockSpec((1, cin, L), lambda n: (n, 0, 0)),
            pl.BlockSpec((cin, 1), lambda n: (0, 0)),
            pl.BlockSpec((cin, 1), lambda n: (0, 0)),
            pl.BlockSpec((K, cout, cin), lambda n: (0, 0, 0)),
            pl.BlockSpec((cout, 1), lambda n: (0, 0)),
        ],
        out_specs=(pl.BlockSpec((1, cout, L), lambda n: (n, 0, 0)),
                   pl.BlockSpec((1, cout, 1), lambda n: (n, 0, 0)),
                   pl.BlockSpec((1, cout, 1), lambda n: (n, 0, 0))),
        scratch_shapes=[pltpu.VMEM((cin, L + 2 * PAD), jnp.float32)],
        compiler_params=pltpu.CompilerParams(
            dimension_semantics=("parallel",),
            vmem_limit_bytes=_VMEM_LIMIT),
    )(x, scale, shift, w, b)


def _bn_apply(h, scale, shift):
    N, c, L = h.shape
    return pl.pallas_call(
        _bn_apply_kernel,
        out_shape=jax.ShapeDtypeStruct((N, c, L), jnp.float32),
        grid=(N,),
        in_specs=[
            pl.BlockSpec((1, c, L), lambda n: (n, 0, 0)),
            pl.BlockSpec((c, 1), lambda n: (0, 0)),
            pl.BlockSpec((c, 1), lambda n: (0, 0)),
        ],
        out_specs=pl.BlockSpec((1, c, L), lambda n: (n, 0, 0)),
        compiler_params=pltpu.CompilerParams(
            dimension_semantics=("parallel",),
            vmem_limit_bytes=_VMEM_LIMIT),
    )(h, scale, shift)


def _bn_scale_shift(s, ss, gamma, beta, count):
    """Fold training-mode BatchNorm1d (biased variance) into per-channel FMA."""
    total = jnp.sum(s[:, :, 0], axis=0)          # (C,)
    total_sq = jnp.sum(ss[:, :, 0], axis=0)      # (C,)
    mean = total / count
    var = jnp.maximum(total_sq / count - mean * mean, 0.0)
    scale = gamma * jax.lax.rsqrt(var + EPS)
    shift = beta - mean * scale
    return (scale.reshape(-1, 1).astype(jnp.float32),
            shift.reshape(-1, 1).astype(jnp.float32))


def block_forward(x_ncl, params):
    """x_ncl: (N, Cin, L) float32, PyTorch NCL layout. Returns (N, Cout, L)."""
    x = x_ncl.astype(jnp.float32)
    N, cin, L = x.shape
    cout = params["w1"].shape[0]

    # torch conv weight (O, C, K) -> per-tap (K, O, C)
    w1 = jnp.transpose(params["w1"], (2, 0, 1))
    w2 = jnp.transpose(params["w2"], (2, 0, 1))
    b1 = params["b1"].reshape(cout, 1).astype(jnp.float32)
    b2 = params["b2"].reshape(cout, 1).astype(jnp.float32)

    one = jnp.ones((cin, 1), jnp.float32)
    zero = jnp.zeros((cin, 1), jnp.float32)

    # Conv1 + ReLU (+ BN1 partial statistics)
    h1, s1, ss1 = _conv_relu_stats(x, one, zero, w1, b1)
    scale1, shift1 = _bn_scale_shift(s1, ss1, params["g1"], params["be1"], N * L)

    # BN1 apply fused into Conv2 + ReLU (+ BN2 partial statistics)
    h2, s2, ss2 = _conv_relu_stats(h1, scale1, shift1, w2, b2)
    scale2, shift2 = _bn_scale_shift(s2, ss2, params["g2"], params["be2"], N * L)

    # BN2 apply
    return _bn_apply(h2, scale2, shift2)


# --------------------- plain-JAX reference for sanity check -------------------
def block_reference(x, p):
    def conv(h, w, b):
        N, C, L = h.shape
        hp = jnp.pad(h, ((0, 0), (0, 0), (PAD, PAD)))
        out = jnp.zeros((N, w.shape[0], L), jnp.float32) + b[None, :, None]
        for k in range(K):
            out = out + jnp.einsum("ncl,oc->nol", hp[:, :, k:k + L], w[:, :, k])
        return out

    def bn(h, g, be):
        m = h.mean(axis=(0, 2), keepdims=True)
        v = ((h - m) ** 2).mean(axis=(0, 2), keepdims=True)
        return (h - m) / jnp.sqrt(v + EPS) * g[None, :, None] + be[None, :, None]

    h = bn(jnp.maximum(conv(x, p["w1"], p["b1"]), 0.0), p["g1"], p["be1"])
    h = bn(jnp.maximum(conv(h, p["w2"], p["b2"]), 0.0), p["g2"], p["be2"])
    return h


if __name__ == "__main__":
    N, Cin, Cout, L = 2, 4, 8, 16

    key = jax.random.PRNGKey(0)
    ks = jax.random.split(key, 8)
    sc1 = 1.0 / (Cin * K) ** 0.5
    sc2 = 1.0 / (Cout * K) ** 0.5
    params = {
        "w1": jax.random.normal(ks[0], (Cout, Cin, K), jnp.float32) * sc1,
        "b1": jax.random.normal(ks[1], (Cout,), jnp.float32) * sc1,
        "w2": jax.random.normal(ks[2], (Cout, Cout, K), jnp.float32) * sc2,
        "b2": jax.random.normal(ks[3], (Cout,), jnp.float32) * sc2,
        # BatchNorm affine params (PyTorch default ones/zeros; perturbed a bit
        # deterministically so the broadcast path is exercised)
        "g1": 1.0 + 0.1 * jax.random.normal(ks[4], (Cout,), jnp.float32),
        "be1": 0.1 * jax.random.normal(ks[5], (Cout,), jnp.float32),
        "g2": 1.0 + 0.1 * jax.random.normal(ks[6], (Cout,), jnp.float32),
        "be2": 0.1 * jax.random.normal(ks[7], (Cout,), jnp.float32),
    }

    x = jax.random.normal(jax.random.PRNGKey(1), (N, Cin, L), jnp.float32)

    out = jax.block_until_ready(block_forward(x, params))
    ref = block_reference(x, params)

    assert out.shape == (N, Cout, L)
    assert bool(jnp.all(jnp.isfinite(out)))
    assert bool(jnp.allclose(out, ref, atol=1e-2, rtol=1e-2)), "mismatch vs reference"

    print("KERNEL_OK")
</pallas_src>

<mosaic_0001>
module attributes {stable_mosaic.version = 11 : i64} {
  func.func @_conv_relu_stats_kernel(%arg0: i32, %arg1: memref<1x4x16xf32, #tpu.memory_space<vmem>>, %arg2: memref<4x1xf32, #tpu.memory_space<vmem>>, %arg3: memref<4x1xf32, #tpu.memory_space<vmem>>, %arg4: memref<5x8x4xf32, #tpu.memory_space<vmem>>, %arg5: memref<8x1xf32, #tpu.memory_space<vmem>>, %arg6: memref<1x8x16xf32, #tpu.memory_space<vmem>>, %arg7: memref<1x8x1xf32, #tpu.memory_space<vmem>>, %arg8: memref<1x8x1xf32, #tpu.memory_space<vmem>>, %arg9: memref<4x20xf32, #tpu.memory_space<vmem>>) attributes {dimension_semantics = [#tpu.dimension_semantics<parallel>], iteration_bounds = array<i64: 2>, scalar_prefetch = 0 : i64, scratch_operands = 1 : i64, tpu.core_type = #tpu.core_type<tc>, window_params = [{transform_indices = @transform_0, window_bounds = array<i64: 1, 4, 16>}, {pipeline_mode = #tpu.pipeline_mode<synchronous>, transform_indices = @transform_1, window_bounds = array<i64: 4, 1>}, {pipeline_mode = #tpu.pipeline_mode<synchronous>, transform_indices = @transform_2, window_bounds = array<i64: 4, 1>}, {pipeline_mode = #tpu.pipeline_mode<synchronous>, transform_indices = @transform_3, window_bounds = array<i64: 5, 8, 4>}, {pipeline_mode = #tpu.pipeline_mode<synchronous>, transform_indices = @transform_4, window_bounds = array<i64: 8, 1>}, {transform_indices = @transform_5, window_bounds = array<i64: 1, 8, 16>}, {transform_indices = @transform_6, window_bounds = array<i64: 1, 8, 1>}, {transform_indices = @transform_7, window_bounds = array<i64: 1, 8, 1>}]} {
    %cst = arith.constant 0.000000e+00 : f32
    %0 = vector.broadcast %cst : f32 to vector<4x2xf32>
    %c0 = arith.constant 0 : index
    %c0_0 = arith.constant 0 : index
    %1 = vector.load %arg9[%c0, %c0_0] : memref<4x20xf32, #tpu.memory_space<vmem>>, vector<4x2xf32>
    tpu.vector_store %arg9[%c0, %c0_0], %0 {strides = array<i32>} : memref<4x20xf32, #tpu.memory_space<vmem>>, vector<4x2xf32>,
    %cst_1 = arith.constant 0.000000e+00 : f32
    %2 = vector.broadcast %cst_1 : f32 to vector<4x2xf32>
    %c0_2 = arith.constant 0 : index
    %c18 = arith.constant 18 : index
    %3 = vector.load %arg9[%c0_2, %c18] : memref<4x20xf32, #tpu.memory_space<vmem>>, vector<4x2xf32>
    tpu.vector_store %arg9[%c0_2, %c18], %2 {strides = array<i32>} : memref<4x20xf32, #tpu.memory_space<vmem>>, vector<4x2xf32>,
    %c0_3 = arith.constant 0 : index
    %c0_4 = arith.constant 0 : index
    %c0_5 = arith.constant 0 : index
    %4 = vector.load %arg1[%c0_3, %c0_4, %c0_5] : memref<1x4x16xf32, #tpu.memory_space<vmem>>, vector<1x4x16xf32>
    %5 = vector.shape_cast %4 : vector<1x4x16xf32> to vector<4x16xf32>
    %c0_6 = arith.constant 0 : index
    %c0_7 = arith.constant 0 : index
    %6 = vector.load %arg2[%c0_6, %c0_7] : memref<4x1xf32, #tpu.memory_space<vmem>>, vector<4x1xf32>
    %7 = vector.broadcast %6 : vector<4x1xf32> to vector<4x16xf32>
    %8 = arith.mulf %5, %7 : vector<4x16xf32>
    %c0_8 = arith.constant 0 : index
    %c0_9 = arith.constant 0 : index
    %9 = vector.load %arg3[%c0_8, %c0_9] : memref<4x1xf32, #tpu.memory_space<vmem>>, vector<4x1xf32>
    %10 = vector.broadcast %9 : vector<4x1xf32> to vector<4x16xf32>
    %11 = arith.addf %8, %10 : vector<4x16xf32>
    %c0_10 = arith.constant 0 : index
    %c2 = arith.constant 2 : index
    %12 = vector.load %arg9[%c0_10, %c2] : memref<4x20xf32, #tpu.memory_space<vmem>>, vector<4x16xf32>
    tpu.vector_store %arg9[%c0_10, %c2], %11 {strides = array<i32>} : memref<4x20xf32, #tpu.memory_space<vmem>>, vector<4x16xf32>,
    %cst_11 = arith.constant 0.000000e+00 : f32
    %13 = vector.broadcast %cst_11 : f32 to vector<8x16xf32>
    %c0_12 = arith.constant 0 : index
    %c0_13 = arith.constant 0 : index
    %c0_14 = arith.constant 0 : index
    %14 = vector.load %arg4[%c0_12, %c0_13, %c0_14] : memref<5x8x4xf32, #tpu.memory_space<vmem>>, vector<1x8x4xf32>
    %15 = vector.shape_cast %14 : vector<1x8x4xf32> to vector<8x4xf32>
    %c0_15 = arith.constant 0 : index
    %c0_16 = arith.constant 0 : index
    %16 = vector.load %arg9[%c0_15, %c0_16] : memref<4x20xf32, #tpu.memory_space<vmem>>, vector<4x16xf32>
    %cst_17 = arith.constant dense<0.000000e+00> : vector<8x16xf32>
    %17 = tpu.matmul %15, %16, %cst_17 {dimension_numbers = #tpu.dot_dimension_numbers<[1], [0], [0], [1], [0, 0, 1, 1], [], []>} : vector<8x4xf32>, vector<4x16xf32>, vector<8x16xf32> -> vector<8x16xf32>
    %18 = arith.addf %13, %17 : vector<8x16xf32>
    %c1 = arith.constant 1 : index
    %c0_18 = arith.constant 0 : index
    %c0_19 = arith.constant 0 : index
    %19 = vector.load %arg4[%c1, %c0_18, %c0_19] : memref<5x8x4xf32, #tpu.memory_space<vmem>>, vector<1x8x4xf32>
    %20 = vector.shape_cast %19 : vector<1x8x4xf32> to vector<8x4xf32>
    %c0_20 = arith.constant 0 : index
    %c1_21 = arith.constant 1 : index
    %21 = vector.load %arg9[%c0_20, %c1_21] : memref<4x20xf32, #tpu.memory_space<vmem>>, vector<4x16xf32>
    %cst_22 = arith.constant dense<0.000000e+00> : vector<8x16xf32>
    %22 = tpu.matmul %20, %21, %cst_22 {dimension_numbers = #tpu.dot_dimension_numbers<[1], [0], [0], [1], [0, 0, 1, 1], [], []>} : vector<8x4xf32>, vector<4x16xf32>, vector<8x16xf32> -> vector<8x16xf32>
    %23 = arith.addf %18, %22 : vector<8x16xf32>
    %c2_23 = arith.constant 2 : index
    %c0_24 = arith.constant 0 : index
    %c0_25 = arith.constant 0 : index
    %24 = vector.load %arg4[%c2_23, %c0_24, %c0_25] : memref<5x8x4xf32, #tpu.memory_space<vmem>>, vector<1x8x4xf32>
    %25 = vector.shape_cast %24 : vector<1x8x4xf32> to vector<8x4xf32>
    %c0_26 = arith.constant 0 : index
    %c2_27 = arith.constant 2 : index
    %26 = vector.load %arg9[%c0_26, %c2_27] : memref<4x20xf32, #tpu.memory_space<vmem>>, vector<4x16xf32>
    %cst_28 = arith.constant dense<0.000000e+00> : vector<8x16xf32>
    %27 = tpu.matmul %25, %26, %cst_28 {dimension_numbers = #tpu.dot_dimension_numbers<[1], [0], [0], [1], [0, 0, 1, 1], [], []>} : vector<8x4xf32>, vector<4x16xf32>, vector<8x16xf32> -> vector<8x16xf32>
    %28 = arith.addf %23, %27 : vector<8x16xf32>
    %c3 = arith.constant 3 : index
    %c0_29 = arith.constant 0 : index
    %c0_30 = arith.constant 0 : index
    %29 = vector.load %arg4[%c3, %c0_29, %c0_30] : memref<5x8x4xf32, #tpu.memory_space<vmem>>, vector<1x8x4xf32>
    %30 = vector.shape_cast %29 : vector<1x8x4xf32> to vector<8x4xf32>
    %c0_31 = arith.constant 0 : index
    %c3_32 = arith.constant 3 : index
    %31 = vector.load %arg9[%c0_31, %c3_32] : memref<4x20xf32, #tpu.memory_space<vmem>>, vector<4x16xf32>
    %cst_33 = arith.constant dense<0.000000e+00> : vector<8x16xf32>
    %32 = tpu.matmul %30, %31, %cst_33 {dimension_numbers = #tpu.dot_dimension_numbers<[1], [0], [0], [1], [0, 0, 1, 1], [], []>} : vector<8x4xf32>, vector<4x16xf32>, vector<8x16xf32> -> vector<8x16xf32>
    %33 = arith.addf %28, %32 : vector<8x16xf32>
    %c4 = arith.constant 4 : index
    %c0_34 = arith.constant 0 : index
    %c0_35 = arith.constant 0 : index
    %34 = vector.load %arg4[%c4, %c0_34, %c0_35] : memref<5x8x4xf32, #tpu.memory_space<vmem>>, vector<1x8x4xf32>
    %35 = vector.shape_cast %34 : vector<1x8x4xf32> to vector<8x4xf32>
    %c0_36 = arith.constant 0 : index
    %c4_37 = arith.constant 4 : index
    %36 = vector.load %arg9[%c0_36, %c4_37] : memref<4x20xf32, #tpu.memory_space<vmem>>, vector<4x16xf32>
    %cst_38 = arith.constant dense<0.000000e+00> : vector<8x16xf32>
    %37 = tpu.matmul %35, %36, %cst_38 {dimension_numbers = #tpu.dot_dimension_numbers<[1], [0], [0], [1], [0, 0, 1, 1], [], []>} : vector<8x4xf32>, vector<4x16xf32>, vector<8x16xf32> -> vector<8x16xf32>
    %38 = arith.addf %33, %37 : vector<8x16xf32>
    %c0_39 = arith.constant 0 : index
    %c0_40 = arith.constant 0 : index
    %39 = vector.load %arg5[%c0_39, %c0_40] : memref<8x1xf32, #tpu.memory_space<vmem>>, vector<8x1xf32>
    %40 = vector.broadcast %39 : vector<8x1xf32> to vector<8x16xf32>
    %41 = arith.addf %38, %40 : vector<8x16xf32>
    %cst_41 = arith.constant 0.000000e+00 : f32
    %42 = vector.broadcast %cst_41 : f32 to vector<8x16xf32>
    %43 = arith.maximumf %41, %42 : vector<8x16xf32>
    %c0_42 = arith.constant 0 : index
    %c0_43 = arith.constant 0 : index
    %c0_44 = arith.constant 0 : index
    %44 = vector.load %arg6[%c0_42, %c0_43, %c0_44] : memref<1x8x16xf32, #tpu.memory_space<vmem>>, vector<1x8x16xf32>
    %45 = vector.shape_cast %44 : vector<1x8x16xf32> to vector<8x16xf32>
    %46 = vector.shape_cast %43 : vector<8x16xf32> to vector<1x8x16xf32>
    tpu.vector_store %arg6[%c0_42, %c0_43, %c0_44], %46 {strides = array<i32>} : memref<1x8x16xf32, #tpu.memory_space<vmem>>, vector<1x8x16xf32>,
    %cst_45 = arith.constant dense<0.000000e+00> : vector<8xf32>
    %47 = vector.multi_reduction <add>, %43, %cst_45 [1] : vector<8x16xf32> to vector<8xf32>
    %48 = vector.shape_cast %47 : vector<8xf32> to vector<8x1xf32>
    %c0_46 = arith.constant 0 : index
    %c0_47 = arith.constant 0 : index
    %c0_48 = arith.constant 0 : index
    %49 = vector.load %arg7[%c0_46, %c0_47, %c0_48] : memref<1x8x1xf32, #tpu.memory_space<vmem>>, vector<1x8x1xf32>
    %50 = vector.shape_cast %49 : vector<1x8x1xf32> to vector<8x1xf32>
    %51 = vector.shape_cast %48 : vector<8x1xf32> to vector<1x8x1xf32>
    tpu.vector_store %arg7[%c0_46, %c0_47, %c0_48], %51 {strides = array<i32>} : memref<1x8x1xf32, #tpu.memory_space<vmem>>, vector<1x8x1xf32>,
    %52 = arith.mulf %43, %43 : vector<8x16xf32>
    %cst_49 = arith.constant dense<0.000000e+00> : vector<8xf32>
    %53 = vector.multi_reduction <add>, %52, %cst_49 [1] : vector<8x16xf32> to vector<8xf32>
    %54 = vector.shape_cast %53 : vector<8xf32> to vector<8x1xf32>
    %c0_50 = arith.constant 0 : index
    %c0_51 = arith.constant 0 : index
    %c0_52 = arith.constant 0 : index
    %55 = vector.load %arg8[%c0_50, %c0_51, %c0_52] : memref<1x8x1xf32, #tpu.memory_space<vmem>>, vector<1x8x1xf32>
    %56 = vector.shape_cast %55 : vector<1x8x1xf32> to vector<8x1xf32>
    %57 = vector.shape_cast %54 : vector<8x1xf32> to vector<1x8x1xf32>
    tpu.vector_store %arg8[%c0_50, %c0_51, %c0_52], %57 {strides = array<i32>} : memref<1x8x1xf32, #tpu.memory_space<vmem>>, vector<1x8x1xf32>,
    return
  }
  func.func @transform_0(%arg0: i32) -> (i32, i32, i32) {
    %c0_i32 = arith.constant 0 : i32
    %c0_i32_0 = arith.constant 0 : i32
    %c0_i32_1 = arith.constant 0 : i32
    return %arg0, %c0_i32, %c0_i32_0 : i32, i32, i32
  }
  func.func @transform_1(%arg0: i32) -> (i32, i32) {
    %c0_i32 = arith.constant 0 : i32
    %c0_i32_0 = arith.constant 0 : i32
    %c0_i32_1 = arith.constant 0 : i32
    return %c0_i32, %c0_i32_0 : i32, i32
  }
  func.func @transform_2(%arg0: i32) -> (i32, i32) {
    %c0_i32 = arith.constant 0 : i32
    %c0_i32_0 = arith.constant 0 : i32
    %c0_i32_1 = arith.constant 0 : i32
    return %c0_i32, %c0_i32_0 : i32, i32
  }
  func.func @transform_3(%arg0: i32) -> (i32, i32, i32) {
    %c0_i32 = arith.constant 0 : i32
    %c0_i32_0 = arith.constant 0 : i32
    %c0_i32_1 = arith.constant 0 : i32
    %c0_i32_2 = arith.constant 0 : i32
    return %c0_i32, %c0_i32_0, %c0_i32_1 : i32, i32, i32
  }
  func.func @transform_4(%arg0: i32) -> (i32, i32) {
    %c0_i32 = arith.constant 0 : i32
    %c0_i32_0 = arith.constant 0 : i32
    %c0_i32_1 = arith.constant 0 : i32
    return %c0_i32, %c0_i32_0 : i32, i32
  }
  func.func @transform_5(%arg0: i32) -> (i32, i32, i32) {
    %c0_i32 = arith.constant 0 : i32
    %c0_i32_0 = arith.constant 0 : i32
    %c0_i32_1 = arith.constant 0 : i32
    return %arg0, %c0_i32, %c0_i32_0 : i32, i32, i32
  }
  func.func @transform_6(%arg0: i32) -> (i32, i32, i32) {
    %c0_i32 = arith.constant 0 : i32
    %c0_i32_0 = arith.constant 0 : i32
    %c0_i32_1 = arith.constant 0 : i32
    return %arg0, %c0_i32, %c0_i32_0 : i32, i32, i32
  }
  func.func @transform_7(%arg0: i32) -> (i32, i32, i32) {
    %c0_i32 = arith.constant 0 : i32
    %c0_i32_0 = arith.constant 0 : i32
    %c0_i32_1 = arith.constant 0 : i32
    return %arg0, %c0_i32, %c0_i32_0 : i32, i32, i32
  }
}

</mosaic_0001>

<llo_original>
// kernel: tpu_custom_call.1
$region0: #{tpu_custom_call.1}
  #allocation0 [shape = 'u32[]', space=smem, size = 0x4, offset = 0x4, fixed_abs, tag = 'smem constant byte address 0x4 - core index']
  #allocation1 [shape = 'u32[144,128]{1,0:T(1,128)}', space=vmem, size = 0x12000, scoped, tag = 'internal scratch']
  #allocation2 [shape = 'f32[4,20]{1,0:T(4,128)}', space=vmem, size = 0x800, scoped, tag = 'scratch operand']
  %s0 = inlined_call_operand.vmem [shape: f32[2,4,16], index: 0, kind: input, shape index: {}]
  %s1 = inlined_call_operand.vmem [shape: f32[4,1], index: 1, kind: input, shape index: {}]
  %s2 = inlined_call_operand.vmem [shape: f32[4,1], index: 2, kind: input, shape index: {}]
  %s3 = inlined_call_operand.vmem [shape: f32[5,8,4], index: 3, kind: input, shape index: {}]
  %s4 = inlined_call_operand.vmem [shape: f32[8,1], index: 4, kind: input, shape index: {}]
  %s5 = inlined_call_operand.hbm [shape: f32[2,8,16], index: 5, kind: output, shape index: {0}]
  %s6 = inlined_call_operand.vmem [shape: f32[2,8,1], index: 6, kind: output, shape index: {1}]
  %s7 = inlined_call_operand.vmem [shape: f32[2,8,1], index: 7, kind: output, shape index: {2}]
  %8 = xla_tuple %s5, %s6, %s7
  %s9 = sld [smem:[#allocation0]]
  $region69: #{tpu_custom_call.1} parent=0
    _
  %s11 = ssub.s32 1, %s9
  %s12 = scalar_select 0, %s11, %s9
  $region1: #{tpu_custom_call.1} parent=0
    #allocation3 [shape = 'u8[8192]{0}', space=vmem, size = 0x2000, scoped, tag = 'output window, operand 0']
    #allocation4 [shape = 's32[2]{0}', space=sflag, size = 0x8, scoped, tag = 'scoped memory for tpu_custom_call.1']
    %13 = vsyncpa [#allocation4], 0
    %s14 = scalar_lea.sflag [#allocation4], 1
    %15 = vsyncpa %s14, 0
    loop: start=0, step=1, limit=4
    $region2: #{tpu_custom_call.1} parent=1 // loop_pre_header
      _
    $region3: #{tpu_custom_call.1} parent=1 // loop_header
      %s17 = sphi 0, %s21
      %p18 = scmp.ge.s32.totalorder %s17, 4
      %s27 = sphi 0, %s29
      %s30 = sphi 0, %s27
      %s31 = sphi 0, %s30
      %s47 = sphi 0, %s31
      %s51 = sphi 0, %s51
      %s53 = sphi 0, %s51
      %s54 = sphi 0, %s53
      %s68 = sphi 0, %s54
      %s72 = sphi 0, %s72
      %s74 = sphi 0, %s72
      %s75 = sphi 0, %s74
      %s89 = sphi 0, %s75
      %s93 = sphi 0, %s93
      %s95 = sphi 0, %s93
      %s96 = sphi 0, %s95
      %s110 = sphi 0, %s96
      %s114 = sphi 0, %s114
      %s116 = sphi 0, %s114
      %s117 = sphi 0, %s116
      %s131 = sphi 0, %s117
      %s137 = sphi 0, %s139
      %s140 = sphi 0, %s137
      %s141 = sphi 0, %s140
      %s157 = sphi 0, %s141
      %s163 = sphi 0, %s165
      %s166 = sphi 0, %s163
      %s167 = sphi 0, %s166
      %s183 = sphi 0, %s167
      %s189 = sphi 0, %s191
      %s192 = sphi 0, %s189
      %s193 = sphi 0, %s192
      %s209 = sphi 0, %s193
    $region4: #{tpu_custom_call.1} parent=1 // loop_header_branch
      %20 = sbr.rel (%p18) target = $region8
    $region5: #{tpu_custom_call.1} parent=1 // loop_body
      %s22 = ssub.s32 %s17, 1
      %s23 = ssub.s32 %s17, 2
      %s24 = sadd.s32 %s17, 1
      %s25 = ssub.s32 %s17, %s24
      %p26 = scmp.eq.s32.totalorder %s25, 0
      %s28 = sadd.s32 %s27, 1
      %s29 = scalar_select %p26, %s27, %s28
      %p32 = pneg %p26
      %p33 = scmp.eq.s32.totalorder %s17, 1
      %p34 = por %p32, %p33
      %p35 = scmp.ne.s32.totalorder %s27, %s30
      %p36 = scmp.eq.s32.totalorder %s17, 0
      %p37 = por %p35, %p36
      %p38 = scmp.ne.s32.totalorder %s27, %s30
      %p39 = scmp.eq.s32.totalorder %s22, 1
      %p40 = por %p38, %p39
      %p41 = scmp.ne.s32.totalorder %s30, %s31
      %p42 = scmp.eq.s32.totalorder %s22, 0
      %p43 = por %p41, %p42
      %p44 = scmp.ne.s32.totalorder %s30, %s31
      %p45 = scmp.eq.s32.totalorder %s23, 1
      %p46 = por %p44, %p45
      %p48 = scmp.ne.s32.totalorder %s31, %s47
      %p49 = scmp.eq.s32.totalorder %s23, 0
      %p50 = por %p48, %p49
      %s52 = sadd.s32 %s51, 1
      %p55 = scmp.eq.s32.totalorder %s17, 1
      %p56 = scmp.ne.s32.totalorder %s51, %s53
      %p57 = scmp.eq.s32.totalorder %s17, 0
      %p58 = por %p56, %p57
      %p59 = scmp.ne.s32.totalorder %s51, %s53
      %p60 = scmp.eq.s32.totalorder %s22, 1
      %p61 = por %p59, %p60
      %p62 = scmp.ne.s32.totalorder %s53, %s54
      %p63 = scmp.eq.s32.totalorder %s22, 0
      %p64 = por %p62, %p63
      %p65 = scmp.ne.s32.totalorder %s53, %s54
      %p66 = scmp.eq.s32.totalorder %s23, 1
      %p67 = por %p65, %p66
      %p69 = scmp.ne.s32.totalorder %s54, %s68
      %p70 = scmp.eq.s32.totalorder %s23, 0
      %p71 = por %p69, %p70
      %s73 = sadd.s32 %s72, 1
      %p76 = scmp.eq.s32.totalorder %s17, 1
      %p77 = scmp.ne.s32.totalorder %s72, %s74
      %p78 = scmp.eq.s32.totalorder %s17, 0
      %p79 = por %p77, %p78
      %p80 = scmp.ne.s32.totalorder %s72, %s74
      %p81 = scmp.eq.s32.totalorder %s22, 1
      %p82 = por %p80, %p81
      %p83 = scmp.ne.s32.totalorder %s74, %s75
      %p84 = scmp.eq.s32.totalorder %s22, 0
      %p85 = por %p83, %p84
      %p86 = scmp.ne.s32.totalorder %s74, %s75
      %p87 = scmp.eq.s32.totalorder %s23, 1
      %p88 = por %p86, %p87
      %p90 = scmp.ne.s32.totalorder %s75, %s89
      %p91 = scmp.eq.s32.totalorder %s23, 0
      %p92 = por %p90, %p91
      %s94 = sadd.s32 %s93, 1
      %p97 = scmp.eq.s32.totalorder %s17, 1
      %p98 = scmp.ne.s32.totalorder %s93, %s95
      %p99 = scmp.eq.s32.totalorder %s17, 0
      %p100 = por %p98, %p99
      %p101 = scmp.ne.s32.totalorder %s93, %s95
      %p102 = scmp.eq.s32.totalorder %s22, 1
      %p103 = por %p101, %p102
      %p104 = scmp.ne.s32.totalorder %s95, %s96
      %p105 = scmp.eq.s32.totalorder %s22, 0
      %p106 = por %p104, %p105
      %p107 = scmp.ne.s32.totalorder %s95, %s96
      %p108 = scmp.eq.s32.totalorder %s23, 1
      %p109 = por %p107, %p108
      %p111 = scmp.ne.s32.totalorder %s96, %s110
      %p112 = scmp.eq.s32.totalorder %s23, 0
      %p113 = por %p111, %p112
      %s115 = sadd.s32 %s114, 1
      %p118 = scmp.eq.s32.totalorder %s17, 1
      %p119 = scmp.ne.s32.totalorder %s114, %s116
      %p120 = scmp.eq.s32.totalorder %s17, 0
      %p121 = por %p119, %p120
      %p122 = scmp.ne.s32.totalorder %s114, %s116
      %p123 = scmp.eq.s32.totalorder %s22, 1
      %p124 = por %p122, %p123
      %p125 = scmp.ne.s32.totalorder %s116, %s117
      %p126 = scmp.eq.s32.totalorder %s22, 0
      %p127 = por %p125, %p126
      %p128 = scmp.ne.s32.totalorder %s116, %s117
      %p129 = scmp.eq.s32.totalorder %s23, 1
      %p130 = por %p128, %p129
      %p132 = scmp.ne.s32.totalorder %s117, %s131
      %p133 = scmp.eq.s32.totalorder %s23, 0
      %p134 = por %p132, %p133
      %s135 = ssub.s32 %s17, %s24
      %p136 = scmp.eq.s32.totalorder %s135, 0
      %s138 = sadd.s32 %s137, 1
      %s139 = scalar_select %p136, %s137, %s138
      %p142 = pneg %p136
      %p143 = scmp.eq.s32.totalorder %s17, 1
      %p144 = por %p142, %p143
      %p145 = scmp.ne.s32.totalorder %s137, %s140
      %p146 = scmp.eq.s32.totalorder %s17, 0
      %p147 = por %p145, %p146
      %p148 = scmp.ne.s32.totalorder %s137, %s140
      %p149 = scmp.eq.s32.totalorder %s22, 1
      %p150 = por %p148, %p149
      %p151 = scmp.ne.s32.totalorder %s140, %s141
      %p152 = scmp.eq.s32.totalorder %s22, 0
      %p153 = por %p151, %p152
      %p154 = scmp.ne.s32.totalorder %s140, %s141
      %p155 = scmp.eq.s32.totalorder %s23, 1
      %p156 = por %p154, %p155
      %p158 = scmp.ne.s32.totalorder %s141, %s157
      %p159 = scmp.eq.s32.totalorder %s23, 0
      %p160 = por %p158, %p159
      %s161 = ssub.s32 %s17, %s24
      %p162 = scmp.eq.s32.totalorder %s161, 0
      %s164 = sadd.s32 %s163, 1
      %s165 = scalar_select %p162, %s163, %s164
      %p168 = pneg %p162
      %p169 = scmp.eq.s32.totalorder %s17, 1
      %p170 = por %p168, %p169
      %p171 = scmp.ne.s32.totalorder %s163, %s166
      %p172 = scmp.eq.s32.totalorder %s17, 0
      %p173 = por %p171, %p172
      %p174 = scmp.ne.s32.totalorder %s163, %s166
      %p175 = scmp.eq.s32.totalorder %s22, 1
      %p176 = por %p174, %p175
      %p177 = scmp.ne.s32.totalorder %s166, %s167
      %p178 = scmp.eq.s32.totalorder %s22, 0
      %p179 = por %p177, %p178
      %p180 = scmp.ne.s32.totalorder %s166, %s167
      %p181 = scmp.eq.s32.totalorder %s23, 1
      %p182 = por %p180, %p181
      %p184 = scmp.ne.s32.totalorder %s167, %s183
      %p185 = scmp.eq.s32.totalorder %s23, 0
      %p186 = por %p184, %p185
      %s187 = ssub.s32 %s17, %s24
      %p188 = scmp.eq.s32.totalorder %s187, 0
      %s190 = sadd.s32 %s189, 1
      %s191 = scalar_select %p188, %s189, %s190
      %p194 = pneg %p188
      %p195 = scmp.eq.s32.totalorder %s17, 1
      %p196 = por %p194, %p195
      %p197 = scmp.ne.s32.totalorder %s189, %s192
      %p198 = scmp.eq.s32.totalorder %s17, 0
      %p199 = por %p197, %p198
      %p200 = scmp.ne.s32.totalorder %s189, %s192
      %p201 = scmp.eq.s32.totalorder %s22, 1
      %p202 = por %p200, %p201
      %p203 = scmp.ne.s32.totalorder %s192, %s193
      %p204 = scmp.eq.s32.totalorder %s22, 0
      %p205 = por %p203, %p204
      %p206 = scmp.ne.s32.totalorder %s192, %s193
      %p207 = scmp.eq.s32.totalorder %s23, 1
      %p208 = por %p206, %p207
      %p210 = scmp.ne.s32.totalorder %s193, %s209
      %p211 = scmp.eq.s32.totalorder %s23, 0
      %p212 = por %p210, %p211
      %p213 = scmp.le.s32.totalorder 1, %s17
      %p214 = scmp.lt.s32.totalorder %s17, 3
      %p215 = pnand %p213, %p214
      %p216 = pneg %p215
      // Predicated region
      $region9: #{tpu_custom_call.1} parent=5 // pred_check
        _
      $region10: #{tpu_custom_call.1} parent=5 // pred_check_branch
        %218 = sbr.rel (%p215) target = $region12
      $region11: #{tpu_custom_call.1} parent=5 // pred_region
        %s219 = ssub.s32 %s17, 1
        // Predicated region
        $region13: #{tpu_custom_call.1} parent=11 // pred_check
          %p220 = pneg %p64
        $region14: #{tpu_custom_call.1} parent=11 // pred_check_branch
          %222 = sbr.rel (%p220) target = $region16
        $region15: #{tpu_custom_call.1} parent=11 // pred_region
          _
        $region16: #{tpu_custom_call.1} parent=11 // pred_fallthru
          _
        // Predicated region
        $region17: #{tpu_custom_call.1} parent=11 // pred_check
          %p223 = pneg %p85
        $region18: #{tpu_custom_call.1} parent=11 // pred_check_branch
          %225 = sbr.rel (%p223) target = $region20
        $region19: #{tpu_custom_call.1} parent=11 // pred_region
          _
        $region20: #{tpu_custom_call.1} parent=11 // pred_fallthru
          _
        // Predicated region
        $region21: #{tpu_custom_call.1} parent=11 // pred_check
          %p226 = pneg %p106
        $region22: #{tpu_custom_call.1} parent=11 // pred_check_branch
          %228 = sbr.rel (%p226) target = $region24
        $region23: #{tpu_custom_call.1} parent=11 // pred_region
          _
        $region24: #{tpu_custom_call.1} parent=11 // pred_fallthru
          _
        // Predicated region
        $region25: #{tpu_custom_call.1} parent=11 // pred_check
          %p229 = pneg %p127
        $region26: #{tpu_custom_call.1} parent=11 // pred_check_branch
          %231 = sbr.rel (%p229) target = $region28
        $region27: #{tpu_custom_call.1} parent=11 // pred_region
          _
        $region28: #{tpu_custom_call.1} parent=11 // pred_fallthru
          _
      $region12: #{tpu_custom_call.1} parent=5 // pred_fallthru
        _
      %p232 = scmp.lt.s32.totalorder %s17, 2
      // Predicated region
      $region29: #{tpu_custom_call.1} parent=5 // pred_check
        %p233 = pneg %p232
      $region30: #{tpu_custom_call.1} parent=5 // pred_check_branch
        %235 = sbr.rel (%p233) target = $region32
      $region31: #{tpu_custom_call.1} parent=5 // pred_region
        // Predicated region
        $region33: #{tpu_custom_call.1} parent=31 // pred_check
          %p236 = pneg %p37
        $region34: #{tpu_custom_call.1} parent=31 // pred_check_branch
          %238 = sbr.rel (%p236) target = $region36
        $region35: #{tpu_custom_call.1} parent=31 // pred_region
          %p239 = scmp.lt.s32.totalorder %s17, 1
          %s240 = scalar_select %p239, %s17, 1
          %s241 = smul.addr %s240, 4
          %s242 = scalar_lea.vmem %s0, %s241
        $region36: #{tpu_custom_call.1} parent=31 // pred_fallthru
          _
      $region32: #{tpu_custom_call.1} parent=5 // pred_fallthru
        _
      %p243 = scmp.le.s32.totalorder 1, %s17
      %p244 = scmp.lt.s32.totalorder %s17, 3
      %p245 = pnand %p243, %p244
      %p246 = pneg %p245
      // Predicated region
      $region37: #{tpu_custom_call.1} parent=5 // pred_check
        _
      $region38: #{tpu_custom_call.1} parent=5 // pred_check_branch
        %248 = sbr.rel (%p245) target = $region40
      $region39: #{tpu_custom_call.1} parent=5 // pred_region
        %s249 = ssub.s32 %s17, 1
        %p250 = scmp.lt.s32.totalorder %s22, 1
        %s251 = scalar_select %p250, %s22, 1
        %s252 = smul.addr %s251, 4
        %s253 = scalar_lea.vmem %s0, %s252
        %p254 = pneg %p43
        %p255 = pneg %p40
        %p256 = pneg %p64
        %p257 = pneg %p61
        %p258 = pneg %p85
        %p259 = pneg %p82
        %p260 = pneg %p106
        %p261 = pneg %p103
        %p262 = pneg %p127
        %p263 = pneg %p124
        %p264 = pneg %p153
        %p265 = pneg %p150
        %s266 = sand.u32 %s140, 1
        %s267 = scalar_lea.sflag [#allocation4], %s266
        %s268 = sand.u32 %s140, 1
        %s269 = smul.addr %s268, 8
        %s270 = scalar_lea.vmem [#allocation3], %s269
        %p271 = pneg %p179
        %p272 = pneg %p176
        %p273 = scmp.lt.s32.totalorder %s22, 1
        %s274 = scalar_select %p273, %s22, 1
        %s275 = smul.addr %s274, 8
        %s276 = scalar_lea.vmem %s6, %s275
        %p277 = pneg %p205
        %p278 = pneg %p202
        %p279 = scmp.lt.s32.totalorder %s22, 1
        %s280 = scalar_select %p279, %s22, 1
        %s281 = smul.addr %s280, 8
        %s282 = scalar_lea.vmem %s7, %s281
        %p283 = scmp.lt.s32.totalorder %s22, 1
        %s284 = scalar_select %p283, %s22, 1
        %s285 = smul.addr %s284, 4
        %s286 = scalar_lea.vmem %s0, %s285
        %p287 = scmp.lt.s32.totalorder %s22, 1
        %s288 = scalar_select %p287, %s22, 1
        %s289 = smul.addr %s288, 8
        %s290 = scalar_lea.vmem %s6, %s289
        %p291 = scmp.lt.s32.totalorder %s22, 1
        %s292 = scalar_select %p291, %s22, 1
        %s293 = smul.addr %s292, 8
        %s294 = scalar_lea.vmem %s7, %s293
        %vm295 = vcmask 11264
        %296 = vst.msk [vmem:[#allocation2] sm:$0xf] %vm295, 0.0
        %vm297 = vcmask 158864
        %298 = vst.msk [vmem:[#allocation2] sm:$0xf] %vm297, 0.0
        %v299 = vld [vmem:[%s286] sm:$0xf]
        %v300 = vld [vmem:[%s1] sm:$0xf]
        %302 = vset.pattern.permute.xlu0 0
        %303 = vperm.xlu0 %302, %v300
        %v304 = vpop.permute.xlu0 %303
        %v306 = vmul.f32 %v299, %v304
        %v307 = vld [vmem:[%s2] sm:$0xf]
        %309 = vset.pattern.permute.xlu0 0
        %310 = vperm.xlu0 %309, %v307
        %v311 = vpop.permute.xlu0 %310
        %v313 = vadd.f32 %v306, %v311
        %315 = vrot.lane.b32.xlu0 %v313, 2
        %v316 = vpop.permute.xlu0 %315
        %vm318 = vcmask 142352
        %319 = vst.msk [vmem:[#allocation2] sm:$0xf] %vm318, %v316
        %v320 = vld [vmem:[%s3] sm:$0xff]
        %v321 = vld [vmem:[#allocation2] sm:$0xf]
        %s322 = scalar_lea.vmem %s3, 8
        %v323 = vld [vmem:[%s322] sm:$0xff]
        %325 = vrot.lane.b32.xlu0 %v321, 127
        %v326 = vpop.permute.xlu0 %325
        %vm327 = vcmask 31744
        %v329 = vsel %vm327, %v323, 0
        %vm331 = vcmask 1043456
        %v332 = vsel %vm331, %v326, 0
        %334 = vmatprep.subr.mxu0 0.0
        %335 = vmatpush1.msra.mxu0 %v332
        %336 = vmatprep.subr.mxu0 0.0
        %337 = vmatpush1.msra.mxu0 0.0
        %338 = vmatprep.subr.mxu0 0.0
        %339 = vmatpush1.msra.mxu0 0.0
        %340 = vmatprep.subr.mxu0 0.0
        %341 = vmatpush1.msra.mxu0 0.0
        %342 = vmatprep.subr.mxu0 0.0
        %343 = vmatpush1.msra.mxu0 0.0
        %344 = vmatprep.subr.mxu0 0.0
        %345 = vmatpush1.msra.mxu0 0.0
        %346 = vmatprep.subr.mxu0 0.0
        %347 = vmatpush1.msra.mxu0 0.0
        %348 = vmatprep.subr.mxu0 0.0
        %349 = vmatpush1.msra.mxu0 0.0
        %350 = vmatprep.subr.mxu0 0.0
        %351 = vmatpush1.msra.mxu0 0.0
        %352 = vmatprep.subr.mxu0 0.0
        %353 = vmatpush1.msra.mxu0 0.0
        %354 = vmatprep.subr.mxu0 0.0
        %355 = vmatpush1.msra.mxu0 0.0
        %356 = vmatprep.subr.mxu0 0.0
        %357 = vmatpush1.msra.mxu0 0.0
        %358 = vmatprep.subr.mxu0 0.0
        %359 = vmatpush1.msra.mxu0 0.0
        %360 = vmatprep.subr.mxu0 0.0
        %361 = vmatpush1.msra.mxu0 0.0
        %362 = vmatprep.subr.mxu0 0.0
        %363 = vmatpush1.msra.mxu0 0.0
        %364 = vmatprep.subr.mxu0 0.0
        %365 = vmatpush1.msra.mxu0 0.0
        %366 = vmatprep.subr.mxu0 0.0
        %367 = vmatpush1.msra.mxu0 0.0
        %368 = vmatprep.subr.mxu0 0.0
        %369 = vmatpush1.msra.mxu0 0.0
        %370 = vmatprep.subr.mxu0 0.0
        %371 = vmatpush1.msra.mxu0 0.0
        %372 = vmatprep.subr.mxu0 0.0
        %373 = vmatpush1.msra.mxu0 0.0
        %374 = vmatprep.subr.mxu0 0.0
        %375 = vmatpush1.msra.mxu0 0.0
        %376 = vmatprep.subr.mxu0 0.0
        %377 = vmatpush1.msra.mxu0 0.0
        %378 = vmatprep.subr.mxu0 0.0
        %379 = vmatpush1.msra.mxu0 0.0
        %380 = vmatprep.subr.mxu0 0.0
        %381 = vmatpush1.msra.mxu0 0.0
        %382 = vmatprep.subr.mxu0 0.0
        %383 = vmatpush1.msra.mxu0 0.0
        %384 = vmatprep.subr.mxu0 0.0
        %385 = vmatpush1.msra.mxu0 0.0
        %386 = vmatprep.subr.mxu0 0.0
        %387 = vmatpush1.msra.mxu0 0.0
        %388 = vmatprep.subr.mxu0 0.0
        %389 = vmatpush1.msra.mxu0 0.0
        %390 = vmatprep.subr.mxu0 0.0
        %391 = vmatpush1.msra.mxu0 0.0
        %392 = vmatprep.subr.mxu0 0.0
        %393 = vmatpush1.msra.mxu0 0.0
        %394 = vmatprep.subr.mxu0 0.0
        %395 = vmatpush1.msra.mxu0 0.0
        %396 = vmatprep.subr.mxu0 0.0
        %397 = vmatpush1.msra.mxu0 0.0
        %398 = vmatprep.mubr.f32.mxu0 0.0
        %399 = vmatmul.mubr.f32.gmra.mrb[0].mxu0 %v329
        %v400 = vpop.f32.mrb[0].mxu0
        %v401 = vadd.f32 0.0, %v400
        %v402 = vpop.f32.mrb[0].mxu0
        %403 = vdwg.mxu0
        %v405 = vsel %vm327, %v320, 0
        %v407 = vsel %vm331, %v321, 0
        %409 = vmatprep.subr.mxu0 0.0
        %410 = vmatpush1.msra.mxu0 %v407
        %411 = vmatprep.subr.mxu0 0.0
        %412 = vmatpush1.msra.mxu0 0.0
        %413 = vmatprep.subr.mxu0 0.0
        %414 = vmatpush1.msra.mxu0 0.0
        %415 = vmatprep.subr.mxu0 0.0
        %416 = vmatpush1.msra.mxu0 0.0
        %417 = vmatprep.subr.mxu0 0.0
        %418 = vmatpush1.msra.mxu0 0.0
        %419 = vmatprep.subr.mxu0 0.0
        %420 = vmatpush1.msra.mxu0 0.0
        %421 = vmatprep.subr.mxu0 0.0
        %422 = vmatpush1.msra.mxu0 0.0
        %423 = vmatprep.subr.mxu0 0.0
        %424 = vmatpush1.msra.mxu0 0.0
        %425 = vmatprep.subr.mxu0 0.0
        %426 = vmatpush1.msra.mxu0 0.0
        %427 = vmatprep.subr.mxu0 0.0
        %428 = vmatpush1.msra.mxu0 0.0
        %429 = vmatprep.subr.mxu0 0.0
        %430 = vmatpush1.msra.mxu0 0.0
        %431 = vmatprep.subr.mxu0 0.0
        %432 = vmatpush1.msra.mxu0 0.0
        %433 = vmatprep.subr.mxu0 0.0
        %434 = vmatpush1.msra.mxu0 0.0
        %435 = vmatprep.subr.mxu0 0.0
        %436 = vmatpush1.msra.mxu0 0.0
        %437 = vmatprep.subr.mxu0 0.0
        %438 = vmatpush1.msra.mxu0 0.0
        %439 = vmatprep.subr.mxu0 0.0
        %440 = vmatpush1.msra.mxu0 0.0
        %441 = vmatprep.subr.mxu0 0.0
        %442 = vmatpush1.msra.mxu0 0.0
        %443 = vmatprep.subr.mxu0 0.0
        %444 = vmatpush1.msra.mxu0 0.0
        %445 = vmatprep.subr.mxu0 0.0
        %446 = vmatpush1.msra.mxu0 0.0
        %447 = vmatprep.subr.mxu0 0.0
        %448 = vmatpush1.msra.mxu0 0.0
        %449 = vmatprep.subr.mxu0 0.0
        %450 = vmatpush1.msra.mxu0 0.0
        %451 = vmatprep.subr.mxu0 0.0
        %452 = vmatpush1.msra.mxu0 0.0
        %453 = vmatprep.subr.mxu0 0.0
        %454 = vmatpush1.msra.mxu0 0.0
        %455 = vmatprep.subr.mxu0 0.0
        %456 = vmatpush1.msra.mxu0 0.0
        %457 = vmatprep.subr.mxu0 0.0
        %458 = vmatpush1.msra.mxu0 0.0
        %459 = vmatprep.subr.mxu0 0.0
        %460 = vmatpush1.msra.mxu0 0.0
        %461 = vmatprep.subr.mxu0 0.0
        %462 = vmatpush1.msra.mxu0 0.0
        %463 = vmatprep.subr.mxu0 0.0
        %464 = vmatpush1.msra.mxu0 0.0
        %465 = vmatprep.subr.mxu0 0.0
        %466 = vmatpush1.msra.mxu0 0.0
        %467 = vmatprep.subr.mxu0 0.0
        %468 = vmatpush1.msra.mxu0 0.0
        %469 = vmatprep.subr.mxu0 0.0
        %470 = vmatpush1.msra.mxu0 0.0
        %471 = vmatprep.subr.mxu0 0.0
        %472 = vmatpush1.msra.mxu0 0.0
        %473 = vmatprep.mubr.f32.mxu0 0.0
        %474 = vmatmul.mubr.f32.gmra.mrb[0].mxu0 %v405
        %v475 = vpop.f32.mrb[0].mxu0
        %v476 = vadd.f32 %v401, %v475
        %v477 = vpop.f32.mrb[0].mxu0
        %478 = vdwg.mxu0
        %s479 = scalar_lea.vmem %s3, 16
        %v480 = vld [vmem:[%s479] sm:$0xff]
        %481 = vrot.lane.b32.xlu0 %v321, 126
        %v482 = vpop.permute.xlu0 %481
        %v484 = vsel %vm327, %v480, 0
        %v486 = vsel %vm331, %v482, 0
        %488 = vmatprep.subr.mxu0 0.0
        %489 = vmatpush1.msra.mxu0 %v486
        %490 = vmatprep.subr.mxu0 0.0
        %491 = vmatpush1.msra.mxu0 0.0
        %492 = vmatprep.subr.mxu0 0.0
        %493 = vmatpush1.msra.mxu0 0.0
        %494 = vmatprep.subr.mxu0 0.0
        %495 = vmatpush1.msra.mxu0 0.0
        %496 = vmatprep.subr.mxu0 0.0
        %497 = vmatpush1.msra.mxu0 0.0
        %498 = vmatprep.subr.mxu0 0.0
        %499 = vmatpush1.msra.mxu0 0.0
        %500 = vmatprep.subr.mxu0 0.0
        %501 = vmatpush1.msra.mxu0 0.0
        %502 = vmatprep.subr.mxu0 0.0
        %503 = vmatpush1.msra.mxu0 0.0
        %504 = vmatprep.subr.mxu0 0.0
        %505 = vmatpush1.msra.mxu0 0.0
        %506 = vmatprep.subr.mxu0 0.0
        %507 = vmatpush1.msra.mxu0 0.0
        %508 = vmatprep.subr.mxu0 0.0
        %509 = vmatpush1.msra.mxu0 0.0
        %510 = vmatprep.subr.mxu0 0.0
        %511 = vmatpush1.msra.mxu0 0.0
        %512 = vmatprep.subr.mxu0 0.0
        %513 = vmatpush1.msra.mxu0 0.0
        %514 = vmatprep.subr.mxu0 0.0
        %515 = vmatpush1.msra.mxu0 0.0
        %516 = vmatprep.subr.mxu0 0.0
        %517 = vmatpush1.msra.mxu0 0.0
        %518 = vmatprep.subr.mxu0 0.0
        %519 = vmatpush1.msra.mxu0 0.0
        %520 = vmatprep.subr.mxu0 0.0
        %521 = vmatpush1.msra.mxu0 0.0
        %522 = vmatprep.subr.mxu0 0.0
        %523 = vmatpush1.msra.mxu0 0.0
        %524 = vmatprep.subr.mxu0 0.0
        %525 = vmatpush1.msra.mxu0 0.0
        %526 = vmatprep.subr.mxu0 0.0
        %527 = vmatpush1.msra.mxu0 0.0
        %528 = vmatprep.subr.mxu0 0.0
        %529 = vmatpush1.msra.mxu0 0.0
        %530 = vmatprep.subr.mxu0 0.0
        %531 = vmatpush1.msra.mxu0 0.0
        %532 = vmatprep.subr.mxu0 0.0
        %533 = vmatpush1.msra.mxu0 0.0
        %534 = vmatprep.subr.mxu0 0.0
        %535 = vmatpush1.msra.mxu0 0.0
        %536 = vmatprep.subr.mxu0 0.0
        %537 = vmatpush1.msra.mxu0 0.0
        %538 = vmatprep.subr.mxu0 0.0
        %539 = vmatpush1.msra.mxu0 0.0
        %540 = vmatprep.subr.mxu0 0.0
        %541 = vmatpush1.msra.mxu0 0.0
        %542 = vmatprep.subr.mxu0 0.0
        %543 = vmatpush1.msra.mxu0 0.0
        %544 = vmatprep.subr.mxu0 0.0
        %545 = vmatpush1.msra.mxu0 0.0
        %546 = vmatprep.subr.mxu0 0.0
        %547 = vmatpush1.msra.mxu0 0.0
        %548 = vmatprep.subr.mxu0 0.0
        %549 = vmatpush1.msra.mxu0 0.0
        %550 = vmatprep.subr.mxu0 0.0
        %551 = vmatpush1.msra.mxu0 0.0
        %552 = vmatprep.mubr.f32.mxu0 0.0
        %553 = vmatmul.mubr.f32.gmra.mrb[0].mxu0 %v484
        %v554 = vpop.f32.mrb[0].mxu0
        %v555 = vadd.f32 0.0, %v554
        %v556 = vpop.f32.mrb[0].mxu0
        %557 = vdwg.mxu0
        %v558 = vadd.f32 %v476, %v555
        %s559 = scalar_lea.vmem %s3, 24
        %v560 = vld [vmem:[%s559] sm:$0xff]
        %561 = vrot.lane.b32.xlu0 %v321, 125
        %v562 = vpop.permute.xlu0 %561
        %v564 = vsel %vm327, %v560, 0
        %v566 = vsel %vm331, %v562, 0
        %568 = vmatprep.subr.mxu0 0.0
        %569 = vmatpush1.msra.mxu0 %v566
        %570 = vmatprep.subr.mxu0 0.0
        %571 = vmatpush1.msra.mxu0 0.0
        %572 = vmatprep.subr.mxu0 0.0
        %573 = vmatpush1.msra.mxu0 0.0
        %574 = vmatprep.subr.mxu0 0.0
        %575 = vmatpush1.msra.mxu0 0.0
        %576 = vmatprep.subr.mxu0 0.0
        %577 = vmatpush1.msra.mxu0 0.0
        %578 = vmatprep.subr.mxu0 0.0
        %579 = vmatpush1.msra.mxu0 0.0
        %580 = vmatprep.subr.mxu0 0.0
        %581 = vmatpush1.msra.mxu0 0.0
        %582 = vmatprep.subr.mxu0 0.0
        %583 = vmatpush1.msra.mxu0 0.0
        %584 = vmatprep.subr.mxu0 0.0
        %585 = vmatpush1.msra.mxu0 0.0
        %586 = vmatprep.subr.mxu0 0.0
        %587 = vmatpush1.msra.mxu0 0.0
        %588 = vmatprep.subr.mxu0 0.0
        %589 = vmatpush1.msra.mxu0 0.0
        %590 = vmatprep.subr.mxu0 0.0
        %591 = vmatpush1.msra.mxu0 0.0
        %592 = vmatprep.subr.mxu0 0.0
        %593 = vmatpush1.msra.mxu0 0.0
        %594 = vmatprep.subr.mxu0 0.0
        %595 = vmatpush1.msra.mxu0 0.0
        %596 = vmatprep.subr.mxu0 0.0
        %597 = vmatpush1.msra.mxu0 0.0
        %598 = vmatprep.subr.mxu0 0.0
        %599 = vmatpush1.msra.mxu0 0.0
        %600 = vmatprep.subr.mxu0 0.0
        %601 = vmatpush1.msra.mxu0 0.0
        %602 = vmatprep.subr.mxu0 0.0
        %603 = vmatpush1.msra.mxu0 0.0
        %604 = vmatprep.subr.mxu0 0.0
        %605 = vmatpush1.msra.mxu0 0.0
        %606 = vmatprep.subr.mxu0 0.0
        %607 = vmatpush1.msra.mxu0 0.0
        %608 = vmatprep.subr.mxu0 0.0
        %609 = vmatpush1.msra.mxu0 0.0
        %610 = vmatprep.subr.mxu0 0.0
        %611 = vmatpush1.msra.mxu0 0.0
        %612 = vmatprep.subr.mxu0 0.0
        %613 = vmatpush1.msra.mxu0 0.0
        %614 = vmatprep.subr.mxu0 0.0
        %615 = vmatpush1.msra.mxu0 0.0
        %616 = vmatprep.subr.mxu0 0.0
        %617 = vmatpush1.msra.mxu0 0.0
        %618 = vmatprep.subr.mxu0 0.0
        %619 = vmatpush1.msra.mxu0 0.0
        %620 = vmatprep.subr.mxu0 0.0
        %621 = vmatpush1.msra.mxu0 0.0
        %622 = vmatprep.subr.mxu0 0.0
        %623 = vmatpush1.msra.mxu0 0.0
        %624 = vmatprep.subr.mxu0 0.0
        %625 = vmatpush1.msra.mxu0 0.0
        %626 = vmatprep.subr.mxu0 0.0
        %627 = vmatpush1.msra.mxu0 0.0
        %628 = vmatprep.subr.mxu0 0.0
        %629 = vmatpush1.msra.mxu0 0.0
        %630 = vmatprep.subr.mxu0 0.0
        %631 = vmatpush1.msra.mxu0 0.0
        %632 = vmatprep.mubr.f32.mxu0 0.0
        %633 = vmatmul.mubr.f32.gmra.mrb[0].mxu0 %v564
        %v634 = vpop.f32.mrb[0].mxu0
        %v635 = vadd.f32 0.0, %v634
        %v636 = vpop.f32.mrb[0].mxu0
        %637 = vdwg.mxu0
        %v638 = vadd.f32 %v558, %v635
        %s639 = scalar_lea.vmem %s3, 32
        %v640 = vld [vmem:[%s639] sm:$0xff]
        %641 = vrot.lane.b32.xlu0 %v321, 124
        %v642 = vpop.permute.xlu0 %641
        %v644 = vsel %vm327, %v640, 0
        %v646 = vsel %vm331, %v642, 0
        %648 = vmatprep.subr.mxu0 0.0
        %649 = vmatpush1.msra.mxu0 %v646
        %650 = vmatprep.subr.mxu0 0.0
        %651 = vmatpush1.msra.mxu0 0.0
        %652 = vmatprep.subr.mxu0 0.0
        %653 = vmatpush1.msra.mxu0 0.0
        %654 = vmatprep.subr.mxu0 0.0
        %655 = vmatpush1.msra.mxu0 0.0
        %656 = vmatprep.subr.mxu0 0.0
        %657 = vmatpush1.msra.mxu0 0.0
        %658 = vmatprep.subr.mxu0 0.0
        %659 = vmatpush1.msra.mxu0 0.0
        %660 = vmatprep.subr.mxu0 0.0
        %661 = vmatpush1.msra.mxu0 0.0
        %662 = vmatprep.subr.mxu0 0.0
        %663 = vmatpush1.msra.mxu0 0.0
        %664 = vmatprep.subr.mxu0 0.0
        %665 = vmatpush1.msra.mxu0 0.0
        %666 = vmatprep.subr.mxu0 0.0
        %667 = vmatpush1.msra.mxu0 0.0
        %668 = vmatprep.subr.mxu0 0.0
        %669 = vmatpush1.msra.mxu0 0.0
        %670 = vmatprep.subr.mxu0 0.0
        %671 = vmatpush1.msra.mxu0 0.0
        %672 = vmatprep.subr.mxu0 0.0
        %673 = vmatpush1.msra.mxu0 0.0
        %674 = vmatprep.subr.mxu0 0.0
        %675 = vmatpush1.msra.mxu0 0.0
        %676 = vmatprep.subr.mxu0 0.0
        %677 = vmatpush1.msra.mxu0 0.0
        %678 = vmatprep.subr.mxu0 0.0
        %679 = vmatpush1.msra.mxu0 0.0
        %680 = vmatprep.subr.mxu0 0.0
        %681 = vmatpush1.msra.mxu0 0.0
        %682 = vmatprep.subr.mxu0 0.0
        %683 = vmatpush1.msra.mxu0 0.0
        %684 = vmatprep.subr.mxu0 0.0
        %685 = vmatpush1.msra.mxu0 0.0
        %686 = vmatprep.subr.mxu0 0.0
        %687 = vmatpush1.msra.mxu0 0.0
        %688 = vmatprep.subr.mxu0 0.0
        %689 = vmatpush1.msra.mxu0 0.0
        %690 = vmatprep.subr.mxu0 0.0
        %691 = vmatpush1.msra.mxu0 0.0
        %692 = vmatprep.subr.mxu0 0.0
        %693 = vmatpush1.msra.mxu0 0.0
        %694 = vmatprep.subr.mxu0 0.0
        %695 = vmatpush1.msra.mxu0 0.0
        %696 = vmatprep.subr.mxu0 0.0
        %697 = vmatpush1.msra.mxu0 0.0
        %698 = vmatprep.subr.mxu0 0.0
        %699 = vmatpush1.msra.mxu0 0.0
        %700 = vmatprep.subr.mxu0 0.0
        %701 = vmatpush1.msra.mxu0 0.0
        %702 = vmatprep.subr.mxu0 0.0
        %703 = vmatpush1.msra.mxu0 0.0
        %704 = vmatprep.subr.mxu0 0.0
        %705 = vmatpush1.msra.mxu0 0.0
        %706 = vmatprep.subr.mxu0 0.0
        %707 = vmatpush1.msra.mxu0 0.0
        %708 = vmatprep.subr.mxu0 0.0
        %709 = vmatpush1.msra.mxu0 0.0
        %710 = vmatprep.subr.mxu0 0.0
        %711 = vmatpush1.msra.mxu0 0.0
        %712 = vmatprep.mubr.f32.mxu0 0.0
        %713 = vmatmul.mubr.f32.gmra.mrb[0].mxu0 %v644
        %v714 = vpop.f32.mrb[0].mxu0
        %v715 = vadd.f32 0.0, %v714
        %v716 = vpop.f32.mrb[0].mxu0
        %717 = vdwg.mxu0
        %v718 = vadd.f32 %v638, %v715
        %v719 = vld [vmem:[%s4] sm:$0xff]
        %721 = vset.pattern.permute.xlu0 0
        %722 = vperm.xlu0 %721, %v719
        %v723 = vpop.permute.xlu0 %722
        %v725 = vadd.f32 %v718, %v723
        %v726 = vmax.f32 %v725, 0.0
        %vm727 = vcmask 130048
        %728 = vst.msk [vmem:[%s270] sm:$0xff] %vm727, %v726
        %v729 = vsel %vm727, %v726, 0.0
        %730 = vadd.xlane.f32.xlu0 %v729
        %v731 = vpop.xlane.xlu0 %730
        %vm732 = vcmask 7168
        %733 = vst.msk [vmem:[%s290] sm:$0xff] %vm732, %v731
        %v734 = vmul.f32 %v726, %v726
        %v735 = vsel %vm727, %v734, 0.0
        %736 = vadd.xlane.f32.xlu0 %v735
        %v737 = vpop.xlane.xlu0 %736
        %738 = vst.msk [vmem:[%s294] sm:$0xff] %vm732, %v737
        %s739 = sand.u32 %s140, 1
        %s740 = scalar_lea.sflag [#allocation4], %s739
        %s741 = sand.u32 %s140, 1
        %s742 = smul.addr %s741, 8
        %s743 = scalar_lea.vmem [#allocation3], %s742
        %p744 = scmp.lt.s32.totalorder %s22, 1
        %s745 = scalar_select %p744, %s22, 1
        %s746 = smul.addr %s745, 8
        %s747 = scalar_lea.vmem %s6, %s746
        %p748 = scmp.lt.s32.totalorder %s22, 1
        %s749 = scalar_select %p748, %s22, 1
        %s750 = smul.addr %s749, 8
        %s751 = scalar_lea.vmem %s7, %s750
        // Predicated region
        $region41: #{tpu_custom_call.1} parent=39 // pred_check
          %p752 = pneg %p150
        $region42: #{tpu_custom_call.1} parent=39 // pred_check_branch
          %754 = sbr.rel (%p752) target = $region44
        $region43: #{tpu_custom_call.1} parent=39 // pred_region
          %s756 = ssub.s32 128, 128
          %757 = vsyncadd %s740, %s756
          %s758 = smul.addr %s22, 128
          %s759 = scalar_lea.hbm %s5, %s758
          %s761 = sshll.u32 %s743, 4
          %s762 = int_to_ptr.vmem [resolvable:$true] %s761
          %764 = dma.vmem_to_hbm [thread:$0]  %s762, 128, %s759, %s740
        $region44: #{tpu_custom_call.1} parent=39 // pred_fallthru
          _
        // Predicated region
        $region45: #{tpu_custom_call.1} parent=39 // pred_check
          %p765 = pneg %p176
        $region46: #{tpu_custom_call.1} parent=39 // pred_check_branch
          %767 = sbr.rel (%p765) target = $region48
        $region47: #{tpu_custom_call.1} parent=39 // pred_region
          _
        $region48: #{tpu_custom_call.1} parent=39 // pred_fallthru
          _
        // Predicated region
        $region49: #{tpu_custom_call.1} parent=39 // pred_check
          %p768 = pneg %p202
        $region50: #{tpu_custom_call.1} parent=39 // pred_check_branch
          %770 = sbr.rel (%p768) target = $region52
        $region51: #{tpu_custom_call.1} parent=39 // pred_region
          _
        $region52: #{tpu_custom_call.1} parent=39 // pred_fallthru
          _
      $region40: #{tpu_custom_call.1} parent=5 // pred_fallthru
        _
      %p771 = scmp.le.s32.totalorder 2, %s17
      // Predicated region
      $region53: #{tpu_custom_call.1} parent=5 // pred_check
        %p772 = pneg %p771
      $region54: #{tpu_custom_call.1} parent=5 // pred_check_branch
        %774 = sbr.rel (%p772) target = $region56
      $region55: #{tpu_custom_call.1} parent=5 // pred_region
        %s775 = ssub.s32 %s17, 2
        // Predicated region
        $region57: #{tpu_custom_call.1} parent=55 // pred_check
          %p776 = pneg %p156
        $region58: #{tpu_custom_call.1} parent=55 // pred_check_branch
          %778 = sbr.rel (%p776) target = $region60
        $region59: #{tpu_custom_call.1} parent=55 // pred_region
          %s779 = sand.u32 %s141, 1
          %s780 = scalar_lea.sflag [#allocation4], %s779
          %s781 = sand.u32 %s141, 1
          %s782 = smul.addr %s781, 8
          %s783 = scalar_lea.vmem [#allocation3], %s782
          %784 = dma.done %s780, 128
        $region60: #{tpu_custom_call.1} parent=55 // pred_fallthru
          _
        // Predicated region
        $region61: #{tpu_custom_call.1} parent=55 // pred_check
          %p785 = pneg %p182
        $region62: #{tpu_custom_call.1} parent=55 // pred_check_branch
          %787 = sbr.rel (%p785) target = $region64
        $region63: #{tpu_custom_call.1} parent=55 // pred_region
          %p788 = scmp.lt.s32.totalorder %s23, 1
          %s789 = scalar_select %p788, %s23, 1
          %s790 = smul.addr %s789, 8
          %s791 = scalar_lea.vmem %s6, %s790
        $region64: #{tpu_custom_call.1} parent=55 // pred_fallthru
          _
        // Predicated region
        $region65: #{tpu_custom_call.1} parent=55 // pred_check
          %p792 = pneg %p208
        $region66: #{tpu_custom_call.1} parent=55 // pred_check_branch
          %794 = sbr.rel (%p792) target = $region68
        $region67: #{tpu_custom_call.1} parent=55 // pred_region
          %p795 = scmp.lt.s32.totalorder %s23, 1
          %s796 = scalar_select %p795, %s23, 1
          %s797 = smul.addr %s796, 8
          %s798 = scalar_lea.vmem %s7, %s797
        $region68: #{tpu_custom_call.1} parent=55 // pred_fallthru
          _
      $region56: #{tpu_custom_call.1} parent=5 // pred_fallthru
        _
    $region6: #{tpu_custom_call.1} parent=1 // loop_footer
      %s21 = sadd.s32 1, %s17
    $region7: #{tpu_custom_call.1} parent=1 // loop_footer_branch
      %16 = sbr.rel target = $region3
    $region8: #{tpu_custom_call.1} parent=1 // loop_exit
      _
    %799 = vsyncpa [#allocation4], 1
    %s800 = scalar_lea.sflag [#allocation4], 1
    %801 = vsyncpa %s800, 1

</llo_original>
